<compile_context>
chip_gen: v5e
topology: v5e:2x2
jax: 0.10.0
libtpu: 0.0.40
codegen_flags: <defaults>
</compile_context>

<pallas_src>
import jax
import jax.numpy as jnp
from jax.experimental import pallas as pl
from jax.experimental.pallas import tpu as pltpu

_LANE = 128            # lanes per head segment (one vreg lane-width)
_NEG_BIG = -1e30       # bias fill for dead lanes -> exp() contributes exactly 0


def _make_fused_heads_kernel(num_sub_heads: int, lanes_per_head: int):
    H, L = num_sub_heads, lanes_per_head

    def kernel(x_ref, w_ref, b_ref, o_ref):
        # x_ref: (B, D)  w_ref: (D, H*L)  b_ref: (1, H*L)  o_ref: (B, H*L)
        # One MXU matmul covering all heads; dead weight columns are zero and
        # dead bias lanes are -1e30, so padded logits never win the max and
        # contribute 0 to each head's softmax denominator.
        logits = jnp.dot(x_ref[...], w_ref[...],
                         preferred_element_type=jnp.float32) + b_ref[...]
        # H is tiny and static: fully unrolled loop over 128-lane-aligned
        # segments.  Slices and stores are vreg-aligned -> no lane shuffles,
        # no masked stores.
        for h in range(H):
            sl = logits[:, h * L:(h + 1) * L]
            m = jnp.max(sl, axis=-1, keepdims=True)
            e = jnp.exp(sl - m)
            s = jnp.sum(e, axis=-1, keepdims=True)
            inv = pl.reciprocal(s, approx=True)   # EUP slot
            inv = inv * (2.0 - s * inv)           # one Newton step -> ~f32 exact
            o_ref[:, h * L:(h + 1) * L] = (e * inv).astype(o_ref.dtype)

    return kernel


def cluster_net_mul_head_head(x, w_fused, b_fused, *, num_sub_heads,
                              lanes_per_head=_LANE, block_b=512):
    """x: (B, D) f32; w_fused: (D, H*lanes); b_fused: (1, H*lanes).

    Returns a (B, H, lanes_per_head) f32 array; head h's softmax output
    (== the PyTorch module's results[h]) is out[:, h, :output_k], the
    remaining lanes are exactly 0.
    """
    B, D = x.shape
    H, L = num_sub_heads, lanes_per_head
    HL = H * L
    assert w_fused.shape == (D, HL), (w_fused.shape, (D, HL))
    assert b_fused.shape == (1, HL), (b_fused.shape, (1, HL))

    kernel = _make_fused_heads_kernel(H, L)
    out_shape = jax.ShapeDtypeStruct((B, HL), jnp.float32)
    # Let XLA fuse the producer of x into this call (no HBM bounce of x).
    fuse_x = [True, False, False]

    if B >= 2 * block_b and B % block_b == 0:
        # Large-batch path (matters on v7x's 2 TensorCores): 1-D parallel grid
        # over B, weights/bias resident across the grid, x blocks pipelined.
        out = pl.pallas_call(
            kernel,
            out_shape=out_shape,
            grid=(B // block_b,),
            in_specs=[
                pl.BlockSpec((block_b, D), lambda i: (i, 0)),
                pl.BlockSpec((D, HL), lambda i: (0, 0)),
                pl.BlockSpec((1, HL), lambda i: (0, 0)),
            ],
            out_specs=pl.BlockSpec((block_b, HL), lambda i: (i, 0)),
            compiler_params=pltpu.CompilerParams(
                dimension_semantics=("parallel",),
                allow_input_fusion=fuse_x),
        )(x, w_fused, b_fused)
    else:
        # Small-batch path: single invocation, whole arrays resident in VMEM
        # (x 16 KB + weights 512 KB + out), no double-buffering overhead.
        out = pl.pallas_call(
            kernel,
            out_shape=out_shape,
            in_specs=[
                pl.BlockSpec(memory_space=pltpu.MemorySpace.VMEM),  # x
                pl.BlockSpec(memory_space=pltpu.MemorySpace.VMEM),  # fused W
                pl.BlockSpec(memory_space=pltpu.MemorySpace.VMEM),  # fused b
            ],
            out_specs=pl.BlockSpec(memory_space=pltpu.MemorySpace.VMEM),
            compiler_params=pltpu.CompilerParams(
                allow_input_fusion=fuse_x),
        )(x, w_fused, b_fused)

    # Pure view: last dim stays 128 after the head-major padded reshape, so no
    # re-tiling copy is emitted.
    return out.reshape(B, H, L)


def init_params(key, num_sub_heads, in_features, output_k):
    """PyTorch nn.Linear-style init (uniform(-1/sqrt(D), 1/sqrt(D))).

    Weights stored pre-transposed as (H, D, K) so y = x @ W + b; biases (H, K).
    """
    kw, kb = jax.random.split(key)
    bound = 1.0 / jnp.sqrt(jnp.float32(in_features))
    weights = jax.random.uniform(
        kw, (num_sub_heads, in_features, output_k),
        minval=-bound, maxval=bound, dtype=jnp.float32)
    biases = jax.random.uniform(
        kb, (num_sub_heads, output_k),
        minval=-bound, maxval=bound, dtype=jnp.float32)
    return weights, biases


def fuse_params(weights, biases, lanes_per_head=_LANE):
    """One-time packing: pad each head to its own 128-lane segment.

    weights: (H, D, K) -> (D, H*L) with zero columns in the dead lanes.
    biases:  (H, K)    -> (1, H*L) with -1e30 in the dead lanes (so padded
             logits contribute exactly 0 to each head's softmax denominator).
    """
    H, D, K = weights.shape
    L = ((K + lanes_per_head - 1) // lanes_per_head) * lanes_per_head
    w_pad = jnp.pad(weights, ((0, 0), (0, 0), (0, L - K)))  # zeros
    b_pad = jnp.pad(biases, ((0, 0), (0, L - K)), constant_values=_NEG_BIG)
    w_fused = jnp.transpose(w_pad, (1, 0, 2)).reshape(D, H * L)
    b_fused = b_pad.reshape(1, H * L)
    return w_fused, b_fused, L


if __name__ == "__main__":
    # Shapes consistent with the module:
    #   in_features = 512 * BasicBlock.expansion = 512 (expansion == 1)
    #   output_k    = 16 clusters, num_sub_heads = 2, batch = 8
    B, D, K, H = 8, 512, 16, 2

    key = jax.random.PRNGKey(0)
    kx, kp = jax.random.split(key)
    x = jax.random.normal(kx, (B, D), dtype=jnp.float32)
    weights, biases = init_params(kp, H, D, K)
    w_fused, b_fused, L = fuse_params(weights, biases)

    out = cluster_net_mul_head_head(x, w_fused, b_fused, num_sub_heads=H,
                                    lanes_per_head=L)
    out = jax.block_until_ready(out)

    # Pure-JAX reference check (per-head Linear + Softmax(dim=1)).
    ok = True
    for h in range(H):
        ref = jax.nn.softmax(x @ weights[h] + biases[h], axis=-1)
        got = out[:, h, :K]
        ok &= bool(jnp.allclose(got, ref, atol=1e-5, rtol=1e-5))
        ok &= bool(jnp.allclose(jnp.sum(got, axis=-1), 1.0, atol=1e-5))
        ok &= bool(jnp.allclose(out[:, h, K:], 0.0))   # dead lanes are exactly 0
    assert ok, "Pallas kernel output does not match JAX reference"
    print("KERNEL_OK")
</pallas_src>

<mosaic_0001>
module attributes {stable_mosaic.version = 11 : i64} {
  func.func @kernel(%arg0: memref<8x512xf32, #tpu.memory_space<vmem>>, %arg1: memref<512x256xf32, #tpu.memory_space<vmem>>, %arg2: memref<1x256xf32, #tpu.memory_space<vmem>>, %arg3: memref<8x256xf32, #tpu.memory_space<vmem>>) attributes {dimension_semantics = [], scalar_prefetch = 0 : i64, scratch_operands = 0 : i64, tpu.core_type = #tpu.core_type<tc>} {
    %c0 = arith.constant 0 : index
    %c0_0 = arith.constant 0 : index
    %0 = vector.load %arg0[%c0, %c0_0] : memref<8x512xf32, #tpu.memory_space<vmem>>, vector<8x512xf32>
    %c0_1 = arith.constant 0 : index
    %c0_2 = arith.constant 0 : index
    %1 = vector.load %arg1[%c0_1, %c0_2] : memref<512x256xf32, #tpu.memory_space<vmem>>, vector<512x256xf32>
    %cst = arith.constant dense<0.000000e+00> : vector<8x256xf32>
    %2 = tpu.matmul %0, %1, %cst {dimension_numbers = #tpu.dot_dimension_numbers<[1], [0], [0], [1], [0, 0, 1, 1], [], []>} : vector<8x512xf32>, vector<512x256xf32>, vector<8x256xf32> -> vector<8x256xf32>
    %c0_3 = arith.constant 0 : index
    %c0_4 = arith.constant 0 : index
    %3 = vector.load %arg2[%c0_3, %c0_4] : memref<1x256xf32, #tpu.memory_space<vmem>>, vector<1x256xf32>
    %4 = vector.broadcast %3 : vector<1x256xf32> to vector<8x256xf32>
    %5 = arith.addf %2, %4 : vector<8x256xf32>
    %6 = vector.extract_strided_slice %5 {offsets = [0, 0], sizes = [8, 128], strides = [1, 1]} : vector<8x256xf32> to vector<8x128xf32>
    %cst_5 = arith.constant dense<0xFF800000> : vector<8xf32>
    %7 = vector.multi_reduction <maximumf>, %6, %cst_5 [1] : vector<8x128xf32> to vector<8xf32>
    %8 = vector.shape_cast %7 : vector<8xf32> to vector<8x1xf32>
    %9 = vector.broadcast %8 : vector<8x1xf32> to vector<8x128xf32>
    %10 = arith.subf %6, %9 : vector<8x128xf32>
    %11 = math.exp %10 : vector<8x128xf32>
    %cst_6 = arith.constant dense<0.000000e+00> : vector<8xf32>
    %12 = vector.multi_reduction <add>, %11, %cst_6 [1] : vector<8x128xf32> to vector<8xf32>
    %13 = vector.shape_cast %12 : vector<8xf32> to vector<8x1xf32>
    %14 = tpu.reciprocal %13 {approx = true} : vector<8x1xf32> -> vector<8x1xf32>
    %15 = arith.mulf %13, %14 : vector<8x1xf32>
    %cst_7 = arith.constant 2.000000e+00 : f32
    %16 = vector.broadcast %cst_7 : f32 to vector<8x1xf32>
    %17 = arith.subf %16, %15 : vector<8x1xf32>
    %18 = arith.mulf %14, %17 : vector<8x1xf32>
    %19 = vector.broadcast %18 : vector<8x1xf32> to vector<8x128xf32>
    %20 = arith.mulf %11, %19 : vector<8x128xf32>
    %c0_8 = arith.constant 0 : index
    %c0_9 = arith.constant 0 : index
    %21 = vector.load %arg3[%c0_8, %c0_9] : memref<8x256xf32, #tpu.memory_space<vmem>>, vector<8x128xf32>
    tpu.vector_store %arg3[%c0_8, %c0_9], %20 {strides = array<i32>} : memref<8x256xf32, #tpu.memory_space<vmem>>, vector<8x128xf32>,
    %22 = vector.extract_strided_slice %5 {offsets = [0, 128], sizes = [8, 128], strides = [1, 1]} : vector<8x256xf32> to vector<8x128xf32>
    %cst_10 = arith.constant dense<0xFF800000> : vector<8xf32>
    %23 = vector.multi_reduction <maximumf>, %22, %cst_10 [1] : vector<8x128xf32> to vector<8xf32>
    %24 = vector.shape_cast %23 : vector<8xf32> to vector<8x1xf32>
    %25 = vector.broadcast %24 : vector<8x1xf32> to vector<8x128xf32>
    %26 = arith.subf %22, %25 : vector<8x128xf32>
    %27 = math.exp %26 : vector<8x128xf32>
    %cst_11 = arith.constant dense<0.000000e+00> : vector<8xf32>
    %28 = vector.multi_reduction <add>, %27, %cst_11 [1] : vector<8x128xf32> to vector<8xf32>
    %29 = vector.shape_cast %28 : vector<8xf32> to vector<8x1xf32>
    %30 = tpu.reciprocal %29 {approx = true} : vector<8x1xf32> -> vector<8x1xf32>
    %31 = arith.mulf %29, %30 : vector<8x1xf32>
    %cst_12 = arith.constant 2.000000e+00 : f32
    %32 = vector.broadcast %cst_12 : f32 to vector<8x1xf32>
    %33 = arith.subf %32, %31 : vector<8x1xf32>
    %34 = arith.mulf %30, %33 : vector<8x1xf32>
    %35 = vector.broadcast %34 : vector<8x1xf32> to vector<8x128xf32>
    %36 = arith.mulf %27, %35 : vector<8x128xf32>
    %c0_13 = arith.constant 0 : index
    %c128 = arith.constant 128 : index
    %37 = vector.load %arg3[%c0_13, %c128] : memref<8x256xf32, #tpu.memory_space<vmem>>, vector<8x128xf32>
    tpu.vector_store %arg3[%c0_13, %c128], %36 {strides = array<i32>} : memref<8x256xf32, #tpu.memory_space<vmem>>, vector<8x128xf32>,
    return
  }
}

</mosaic_0001>

<llo_original>
// kernel: tpu_custom_call.1
$region0: #{tpu_custom_call.1}
  #allocation0 [shape = 'u32[]', space=smem, size = 0x4, offset = 0x4, fixed_abs, tag = 'smem constant byte address 0x4 - core index']
  #allocation1 [shape = 'u32[72,128]{1,0:T(1,128)}', space=vmem, size = 0x9000, scoped, tag = 'internal scratch']
  %s0 = inlined_call_operand.hbm [shape: f32[8,512], index: 0, kind: input, shape index: {}]
  %s1 = inlined_call_operand.hbm [shape: f32[512,256], index: 1, kind: input, shape index: {}]
  %s2 = inlined_call_operand.hbm [shape: f32[1,256], index: 2, kind: input, shape index: {}]
  %s3 = inlined_call_operand.hbm [shape: f32[8,256], index: 3, kind: output, shape index: {}]
  %s4 = sld [smem:[#allocation0]]
  $region34: #{tpu_custom_call.1} parent=0
    _
  %s6 = ssub.s32 1, %s4
  %s7 = scalar_select 0, %s6, %s4
  $region1: #{tpu_custom_call.1} parent=0
    #allocation2 [shape = 'u8[16384]{0}', space=vmem, size = 0x4000, scoped, tag = 'input window, operand 0, single buffered']
    #allocation3 [shape = 's32[1]{0}', space=sflag, size = 0x4, scoped, tag = 'scoped memory for tpu_custom_call.1']
    #allocation4 [shape = 's32[1]{0}', space=sflag, size = 0x4, scoped, tag = 'scoped memory for tpu_custom_call.1']
    #allocation5 [shape = 'u8[524288]{0}', space=vmem, size = 0x80000, scoped, tag = 'input window, operand 1, single buffered']
    #allocation6 [shape = 's32[1]{0}', space=sflag, size = 0x4, scoped, tag = 'scoped memory for tpu_custom_call.1']
    #allocation7 [shape = 'u8[1024]{0}', space=vmem, size = 0x400, scoped, tag = 'input window, operand 2, single buffered']
    #allocation8 [shape = 'u8[8192]{0}', space=vmem, size = 0x2000, scoped, tag = 'output window, operand 0, single buffered']
    %8 = vsyncpa [#allocation3], 0
    %9 = vsyncpa [#allocation6], 0
    %10 = vsyncpa [#allocation4], 0
    // Predicated region
    $region2: #{tpu_custom_call.1} parent=1 // pred_check
      _
    $region3: #{tpu_custom_call.1} parent=1 // pred_check_branch
      %12 = sbr.rel (0) target = $region5
    $region4: #{tpu_custom_call.1} parent=1 // pred_region
      %14 = vsyncadd [#allocation3], 0
      %s16 = sshll.u32 %s0, 4
      %s17 = int_to_ptr.hbm [resolvable:$true] %s16
      %s18 = sshll.u32 [#allocation2], 4
      %s19 = int_to_ptr.vmem [resolvable:$true] %s18
      %21 = dma.hbm_to_vmem [thread:$0]  %s17, 512, %s19, [#allocation3]
    $region5: #{tpu_custom_call.1} parent=1 // pred_fallthru
      _
    // Predicated region
    $region6: #{tpu_custom_call.1} parent=1 // pred_check
      _
    $region7: #{tpu_custom_call.1} parent=1 // pred_check_branch
      %23 = sbr.rel (0) target = $region9
    $region8: #{tpu_custom_call.1} parent=1 // pred_region
      %25 = vsyncadd [#allocation6], 0
      %s26 = sshll.u32 %s1, 4
      %s27 = int_to_ptr.hbm [resolvable:$true] %s26
      %s28 = sshll.u32 [#allocation5], 4
      %s29 = int_to_ptr.vmem [resolvable:$true] %s28
      %34 = dma.hbm_to_vmem [thread:$0]  %s27, 16384, %s29, [#allocation6], 256, 256, 16
    $region9: #{tpu_custom_call.1} parent=1 // pred_fallthru
      _
    // Predicated region
    $region10: #{tpu_custom_call.1} parent=1 // pred_check
      _
    $region11: #{tpu_custom_call.1} parent=1 // pred_check_branch
      %36 = sbr.rel (0) target = $region13
    $region12: #{tpu_custom_call.1} parent=1 // pred_region
      %38 = vsyncadd [#allocation6], 0
      %s40 = sshll.u32 %s2, 4
      %s41 = int_to_ptr.hbm [resolvable:$true] %s40
      %s42 = sshll.u32 [#allocation7], 4
      %s43 = int_to_ptr.vmem [resolvable:$true] %s42
      %45 = dma.hbm_to_vmem [thread:$0]  %s41, 32, %s43, [#allocation6]
    $region13: #{tpu_custom_call.1} parent=1 // pred_fallthru
      _
    // Predicated region
    $region14: #{tpu_custom_call.1} parent=1 // pred_check
      _
    $region15: #{tpu_custom_call.1} parent=1 // pred_check_branch
      %47 = sbr.rel (0) target = $region17
    $region16: #{tpu_custom_call.1} parent=1 // pred_region
      %49 = dma.done [#allocation3], 512
    $region17: #{tpu_custom_call.1} parent=1 // pred_fallthru
      _
    // Predicated region
    $region18: #{tpu_custom_call.1} parent=1 // pred_check
      _
    $region19: #{tpu_custom_call.1} parent=1 // pred_check_branch
      %51 = sbr.rel (0) target = $region21
    $region20: #{tpu_custom_call.1} parent=1 // pred_region
      %53 = dma.done [#allocation6], 16384
    $region21: #{tpu_custom_call.1} parent=1 // pred_fallthru
      _
    // Predicated region
    $region22: #{tpu_custom_call.1} parent=1 // pred_check
      _
    $region23: #{tpu_custom_call.1} parent=1 // pred_check_branch
      %55 = sbr.rel (0) target = $region25
    $region24: #{tpu_custom_call.1} parent=1 // pred_region
      %57 = dma.done [#allocation6], 32
    $region25: #{tpu_custom_call.1} parent=1 // pred_fallthru
      _
    %v58 = vld [vmem:[#allocation2] sm:$0xff]
    %v59 = vld [vmem:[#allocation2 + $0x8] sm:$0xff]
    %v60 = vld [vmem:[#allocation2 + $0x10] sm:$0xff]
    %v61 = vld [vmem:[#allocation2 + $0x18] sm:$0xff]
    %v62 = vld [vmem:[#allocation5] sm:$0xff]
    %v63 = vld [vmem:[#allocation5 + $0x8] sm:$0xff]
    %v64 = vld [vmem:[#allocation5 + $0x10] sm:$0xff]
    %v65 = vld [vmem:[#allocation5 + $0x18] sm:$0xff]
    %v66 = vld [vmem:[#allocation5 + $0x20] sm:$0xff]
    %v67 = vld [vmem:[#allocation5 + $0x28] sm:$0xff]
    %v68 = vld [vmem:[#allocation5 + $0x30] sm:$0xff]
    %v69 = vld [vmem:[#allocation5 + $0x38] sm:$0xff]
    %v70 = vld [vmem:[#allocation5 + $0x40] sm:$0xff]
    %v71 = vld [vmem:[#allocation5 + $0x48] sm:$0xff]
    %v72 = vld [vmem:[#allocation5 + $0x50] sm:$0xff]
    %v73 = vld [vmem:[#allocation5 + $0x58] sm:$0xff]
    %v74 = vld [vmem:[#allocation5 + $0x60] sm:$0xff]
    %v75 = vld [vmem:[#allocation5 + $0x68] sm:$0xff]
    %v76 = vld [vmem:[#allocation5 + $0x70] sm:$0xff]
    %v77 = vld [vmem:[#allocation5 + $0x78] sm:$0xff]
    %v78 = vld [vmem:[#allocation5 + $0x80] sm:$0xff]
    %v79 = vld [vmem:[#allocation5 + $0x88] sm:$0xff]
    %v80 = vld [vmem:[#allocation5 + $0x90] sm:$0xff]
    %v81 = vld [vmem:[#allocation5 + $0x98] sm:$0xff]
    %v82 = vld [vmem:[#allocation5 + $0xa0] sm:$0xff]
    %v83 = vld [vmem:[#allocation5 + $0xa8] sm:$0xff]
    %v84 = vld [vmem:[#allocation5 + $0xb0] sm:$0xff]
    %v85 = vld [vmem:[#allocation5 + $0xb8] sm:$0xff]
    %v86 = vld [vmem:[#allocation5 + $0xc0] sm:$0xff]
    %v87 = vld [vmem:[#allocation5 + $0xc8] sm:$0xff]
    %v88 = vld [vmem:[#allocation5 + $0xd0] sm:$0xff]
    %v89 = vld [vmem:[#allocation5 + $0xd8] sm:$0xff]
    %v90 = vld [vmem:[#allocation5 + $0xe0] sm:$0xff]
    %v91 = vld [vmem:[#allocation5 + $0xe8] sm:$0xff]
    %v92 = vld [vmem:[#allocation5 + $0xf0] sm:$0xff]
    %v93 = vld [vmem:[#allocation5 + $0xf8] sm:$0xff]
    %v94 = vld [vmem:[#allocation5 + $0x100] sm:$0xff]
    %v95 = vld [vmem:[#allocation5 + $0x108] sm:$0xff]
    %v96 = vld [vmem:[#allocation5 + $0x110] sm:$0xff]
    %v97 = vld [vmem:[#allocation5 + $0x118] sm:$0xff]
    %v98 = vld [vmem:[#allocation5 + $0x120] sm:$0xff]
    %v99 = vld [vmem:[#allocation5 + $0x128] sm:$0xff]
    %v100 = vld [vmem:[#allocation5 + $0x130] sm:$0xff]
    %v101 = vld [vmem:[#allocation5 + $0x138] sm:$0xff]
    %v102 = vld [vmem:[#allocation5 + $0x140] sm:$0xff]
    %v103 = vld [vmem:[#allocation5 + $0x148] sm:$0xff]
    %v104 = vld [vmem:[#allocation5 + $0x150] sm:$0xff]
    %v105 = vld [vmem:[#allocation5 + $0x158] sm:$0xff]
    %v106 = vld [vmem:[#allocation5 + $0x160] sm:$0xff]
    %v107 = vld [vmem:[#allocation5 + $0x168] sm:$0xff]
    %v108 = vld [vmem:[#allocation5 + $0x170] sm:$0xff]
    %v109 = vld [vmem:[#allocation5 + $0x178] sm:$0xff]
    %v110 = vld [vmem:[#allocation5 + $0x180] sm:$0xff]
    %v111 = vld [vmem:[#allocation5 + $0x188] sm:$0xff]
    %v112 = vld [vmem:[#allocation5 + $0x190] sm:$0xff]
    %v113 = vld [vmem:[#allocation5 + $0x198] sm:$0xff]
    %v114 = vld [vmem:[#allocation5 + $0x1a0] sm:$0xff]
    %v115 = vld [vmem:[#allocation5 + $0x1a8] sm:$0xff]
    %v116 = vld [vmem:[#allocation5 + $0x1b0] sm:$0xff]
    %v117 = vld [vmem:[#allocation5 + $0x1b8] sm:$0xff]
    %v118 = vld [vmem:[#allocation5 + $0x1c0] sm:$0xff]
    %v119 = vld [vmem:[#allocation5 + $0x1c8] sm:$0xff]
    %v120 = vld [vmem:[#allocation5 + $0x1d0] sm:$0xff]
    %v121 = vld [vmem:[#allocation5 + $0x1d8] sm:$0xff]
    %v122 = vld [vmem:[#allocation5 + $0x1e0] sm:$0xff]
    %v123 = vld [vmem:[#allocation5 + $0x1e8] sm:$0xff]
    %v124 = vld [vmem:[#allocation5 + $0x1f0] sm:$0xff]
    %v125 = vld [vmem:[#allocation5 + $0x1f8] sm:$0xff]
    %v126 = vld [vmem:[#allocation5 + $0x200] sm:$0xff]
    %v127 = vld [vmem:[#allocation5 + $0x208] sm:$0xff]
    %v128 = vld [vmem:[#allocation5 + $0x210] sm:$0xff]
    %v129 = vld [vmem:[#allocation5 + $0x218] sm:$0xff]
    %v130 = vld [vmem:[#allocation5 + $0x220] sm:$0xff]
    %v131 = vld [vmem:[#allocation5 + $0x228] sm:$0xff]
    %v132 = vld [vmem:[#allocation5 + $0x230] sm:$0xff]
    %v133 = vld [vmem:[#allocation5 + $0x238] sm:$0xff]
    %v134 = vld [vmem:[#allocation5 + $0x240] sm:$0xff]
    %v135 = vld [vmem:[#allocation5 + $0x248] sm:$0xff]
    %v136 = vld [vmem:[#allocation5 + $0x250] sm:$0xff]
    %v137 = vld [vmem:[#allocation5 + $0x258] sm:$0xff]
    %v138 = vld [vmem:[#allocation5 + $0x260] sm:$0xff]
    %v139 = vld [vmem:[#allocation5 + $0x268] sm:$0xff]
    %v140 = vld [vmem:[#allocation5 + $0x270] sm:$0xff]
    %v141 = vld [vmem:[#allocation5 + $0x278] sm:$0xff]
    %v142 = vld [vmem:[#allocation5 + $0x280] sm:$0xff]
    %v143 = vld [vmem:[#allocation5 + $0x288] sm:$0xff]
    %v144 = vld [vmem:[#allocation5 + $0x290] sm:$0xff]
    %v145 = vld [vmem:[#allocation5 + $0x298] sm:$0xff]
    %v146 = vld [vmem:[#allocation5 + $0x2a0] sm:$0xff]
    %v147 = vld [vmem:[#allocation5 + $0x2a8] sm:$0xff]
    %v148 = vld [vmem:[#allocation5 + $0x2b0] sm:$0xff]
    %v149 = vld [vmem:[#allocation5 + $0x2b8] sm:$0xff]
    %v150 = vld [vmem:[#allocation5 + $0x2c0] sm:$0xff]
    %v151 = vld [vmem:[#allocation5 + $0x2c8] sm:$0xff]
    %v152 = vld [vmem:[#allocation5 + $0x2d0] sm:$0xff]
    %v153 = vld [vmem:[#allocation5 + $0x2d8] sm:$0xff]
    %v154 = vld [vmem:[#allocation5 + $0x2e0] sm:$0xff]
    %v155 = vld [vmem:[#allocation5 + $0x2e8] sm:$0xff]
    %v156 = vld [vmem:[#allocation5 + $0x2f0] sm:$0xff]
    %v157 = vld [vmem:[#allocation5 + $0x2f8] sm:$0xff]
    %v158 = vld [vmem:[#allocation5 + $0x300] sm:$0xff]
    %v159 = vld [vmem:[#allocation5 + $0x308] sm:$0xff]
    %v160 = vld [vmem:[#allocation5 + $0x310] sm:$0xff]
    %v161 = vld [vmem:[#allocation5 + $0x318] sm:$0xff]
    %v162 = vld [vmem:[#allocation5 + $0x320] sm:$0xff]
    %v163 = vld [vmem:[#allocation5 + $0x328] sm:$0xff]
    %v164 = vld [vmem:[#allocation5 + $0x330] sm:$0xff]
    %v165 = vld [vmem:[#allocation5 + $0x338] sm:$0xff]
    %v166 = vld [vmem:[#allocation5 + $0x340] sm:$0xff]
    %v167 = vld [vmem:[#allocation5 + $0x348] sm:$0xff]
    %v168 = vld [vmem:[#allocation5 + $0x350] sm:$0xff]
    %v169 = vld [vmem:[#allocation5 + $0x358] sm:$0xff]
    %v170 = vld [vmem:[#allocation5 + $0x360] sm:$0xff]
    %v171 = vld [vmem:[#allocation5 + $0x368] sm:$0xff]
    %v172 = vld [vmem:[#allocation5 + $0x370] sm:$0xff]
    %v173 = vld [vmem:[#allocation5 + $0x378] sm:$0xff]
    %v174 = vld [vmem:[#allocation5 + $0x380] sm:$0xff]
    %v175 = vld [vmem:[#allocation5 + $0x388] sm:$0xff]
    %v176 = vld [vmem:[#allocation5 + $0x390] sm:$0xff]
    %v177 = vld [vmem:[#allocation5 + $0x398] sm:$0xff]
    %v178 = vld [vmem:[#allocation5 + $0x3a0] sm:$0xff]
    %v179 = vld [vmem:[#allocation5 + $0x3a8] sm:$0xff]
    %v180 = vld [vmem:[#allocation5 + $0x3b0] sm:$0xff]
    %v181 = vld [vmem:[#allocation5 + $0x3b8] sm:$0xff]
    %v182 = vld [vmem:[#allocation5 + $0x3c0] sm:$0xff]
    %v183 = vld [vmem:[#allocation5 + $0x3c8] sm:$0xff]
    %v184 = vld [vmem:[#allocation5 + $0x3d0] sm:$0xff]
    %v185 = vld [vmem:[#allocation5 + $0x3d8] sm:$0xff]
    %v186 = vld [vmem:[#allocation5 + $0x3e0] sm:$0xff]
    %v187 = vld [vmem:[#allocation5 + $0x3e8] sm:$0xff]
    %v188 = vld [vmem:[#allocation5 + $0x3f0] sm:$0xff]
    %v189 = vld [vmem:[#allocation5 + $0x3f8] sm:$0xff]
    %v190 = vld [vmem:[#allocation7] sm:$0x3]
    %v192 = vperm.slane %v190, 0
    %v193 = vperm.slane %v190, 1
    %196 = vmatpush.msra.mxu0 %v92
    %197 = vmatpush.msra.mxu0 %v90
    %198 = vmatpush.msra.mxu0 %v88
    %199 = vmatpush.msra.mxu0 %v86
    %200 = vmatpush.msra.mxu0 %v84
    %201 = vmatpush.msra.mxu0 %v82
    %202 = vmatpush.msra.mxu0 %v80
    %203 = vmatpush.msra.mxu0 %v78
    %204 = vmatpush.msra.mxu0 %v76
    %205 = vmatpush.msra.mxu0 %v74
    %206 = vmatpush.msra.mxu0 %v72
    %207 = vmatpush.msra.mxu0 %v70
    %208 = vmatpush.msra.mxu0 %v68
    %209 = vmatpush.msra.mxu0 %v66
    %210 = vmatpush.msra.mxu0 %v64
    %211 = vmatpush.msra.mxu0 %v62
    %212 = vmatmul.f32.gmra.mxu0 %v58
    %v213 = vpop.f32.mrf.mxu0
    %v214 = vadd.f32 %v192, %v213
    %215 = vdwg.mxu0
    %216 = vmatpush.msra.mxu0 %v124
    %217 = vmatpush.msra.mxu0 %v122
    %218 = vmatpush.msra.mxu0 %v120
    %219 = vmatpush.msra.mxu0 %v118
    %220 = vmatpush.msra.mxu0 %v116
    %221 = vmatpush.msra.mxu0 %v114
    %222 = vmatpush.msra.mxu0 %v112
    %223 = vmatpush.msra.mxu0 %v110
    %224 = vmatpush.msra.mxu0 %v108
    %225 = vmatpush.msra.mxu0 %v106
    %226 = vmatpush.msra.mxu0 %v104
    %227 = vmatpush.msra.mxu0 %v102
    %228 = vmatpush.msra.mxu0 %v100
    %229 = vmatpush.msra.mxu0 %v98
    %230 = vmatpush.msra.mxu0 %v96
    %231 = vmatpush.msra.mxu0 %v94
    %232 = vmatmul.f32.gmra.mxu0 %v59
    %v233 = vpop.f32.mrf.mxu0
    %v234 = vadd.f32 %v214, %v233
    %235 = vdwg.mxu0
    %236 = vmatpush.msra.mxu0 %v156
    %237 = vmatpush.msra.mxu0 %v154
    %238 = vmatpush.msra.mxu0 %v152
    %239 = vmatpush.msra.mxu0 %v150
    %240 = vmatpush.msra.mxu0 %v148
    %241 = vmatpush.msra.mxu0 %v146
    %242 = vmatpush.msra.mxu0 %v144
    %243 = vmatpush.msra.mxu0 %v142
    %244 = vmatpush.msra.mxu0 %v140
    %245 = vmatpush.msra.mxu0 %v138
    %246 = vmatpush.msra.mxu0 %v136
    %247 = vmatpush.msra.mxu0 %v134
    %248 = vmatpush.msra.mxu0 %v132
    %249 = vmatpush.msra.mxu0 %v130
    %250 = vmatpush.msra.mxu0 %v128
    %251 = vmatpush.msra.mxu0 %v126
    %252 = vmatmul.f32.gmra.mxu0 %v60
    %v253 = vpop.f32.mrf.mxu0
    %v254 = vadd.f32 %v234, %v253
    %255 = vdwg.mxu0
    %256 = vmatpush.msra.mxu0 %v188
    %257 = vmatpush.msra.mxu0 %v186
    %258 = vmatpush.msra.mxu0 %v184
    %259 = vmatpush.msra.mxu0 %v182
    %260 = vmatpush.msra.mxu0 %v180
    %261 = vmatpush.msra.mxu0 %v178
    %262 = vmatpush.msra.mxu0 %v176
    %263 = vmatpush.msra.mxu0 %v174
    %264 = vmatpush.msra.mxu0 %v172
    %265 = vmatpush.msra.mxu0 %v170
    %266 = vmatpush.msra.mxu0 %v168
    %267 = vmatpush.msra.mxu0 %v166
    %268 = vmatpush.msra.mxu0 %v164
    %269 = vmatpush.msra.mxu0 %v162
    %270 = vmatpush.msra.mxu0 %v160
    %271 = vmatpush.msra.mxu0 %v158
    %272 = vmatmul.f32.gmra.mxu0 %v61
    %v273 = vpop.f32.mrf.mxu0
    %v274 = vadd.f32 %v254, %v273
    %275 = vdwg.mxu0
    %276 = vmatpush.msra.mxu0 %v93
    %277 = vmatpush.msra.mxu0 %v91
    %278 = vmatpush.msra.mxu0 %v89
    %279 = vmatpush.msra.mxu0 %v87
    %280 = vmatpush.msra.mxu0 %v85
    %281 = vmatpush.msra.mxu0 %v83
    %282 = vmatpush.msra.mxu0 %v81
    %283 = vmatpush.msra.mxu0 %v79
    %284 = vmatpush.msra.mxu0 %v77
    %285 = vmatpush.msra.mxu0 %v75
    %286 = vmatpush.msra.mxu0 %v73
    %287 = vmatpush.msra.mxu0 %v71
    %288 = vmatpush.msra.mxu0 %v69
    %289 = vmatpush.msra.mxu0 %v67
    %290 = vmatpush.msra.mxu0 %v65
    %291 = vmatpush.msra.mxu0 %v63
    %292 = vmatmul.f32.gmra.mxu0 %v58
    %v293 = vpop.f32.mrf.mxu0
    %v294 = vadd.f32 %v193, %v293
    %295 = vdwg.mxu0
    %296 = vmatpush.msra.mxu0 %v125
    %297 = vmatpush.msra.mxu0 %v123
    %298 = vmatpush.msra.mxu0 %v121
    %299 = vmatpush.msra.mxu0 %v119
    %300 = vmatpush.msra.mxu0 %v117
    %301 = vmatpush.msra.mxu0 %v115
    %302 = vmatpush.msra.mxu0 %v113
    %303 = vmatpush.msra.mxu0 %v111
    %304 = vmatpush.msra.mxu0 %v109
    %305 = vmatpush.msra.mxu0 %v107
    %306 = vmatpush.msra.mxu0 %v105
    %307 = vmatpush.msra.mxu0 %v103
    %308 = vmatpush.msra.mxu0 %v101
    %309 = vmatpush.msra.mxu0 %v99
    %310 = vmatpush.msra.mxu0 %v97
    %311 = vmatpush.msra.mxu0 %v95
    %312 = vmatmul.f32.gmra.mxu0 %v59
    %v313 = vpop.f32.mrf.mxu0
    %v314 = vadd.f32 %v294, %v313
    %315 = vdwg.mxu0
    %316 = vmatpush.msra.mxu0 %v157
    %317 = vmatpush.msra.mxu0 %v155
    %318 = vmatpush.msra.mxu0 %v153
    %319 = vmatpush.msra.mxu0 %v151
    %320 = vmatpush.msra.mxu0 %v149
    %321 = vmatpush.msra.mxu0 %v147
    %322 = vmatpush.msra.mxu0 %v145
    %323 = vmatpush.msra.mxu0 %v143
    %324 = vmatpush.msra.mxu0 %v141
    %325 = vmatpush.msra.mxu0 %v139
    %326 = vmatpush.msra.mxu0 %v137
    %327 = vmatpush.msra.mxu0 %v135
    %328 = vmatpush.msra.mxu0 %v133
    %329 = vmatpush.msra.mxu0 %v131
    %330 = vmatpush.msra.mxu0 %v129
    %331 = vmatpush.msra.mxu0 %v127
    %332 = vmatmul.f32.gmra.mxu0 %v60
    %v333 = vpop.f32.mrf.mxu0
    %v334 = vadd.f32 %v314, %v333
    %335 = vdwg.mxu0
    %336 = vmatpush.msra.mxu0 %v189
    %337 = vmatpush.msra.mxu0 %v187
    %338 = vmatpush.msra.mxu0 %v185
    %339 = vmatpush.msra.mxu0 %v183
    %340 = vmatpush.msra.mxu0 %v181
    %341 = vmatpush.msra.mxu0 %v179
    %342 = vmatpush.msra.mxu0 %v177
    %343 = vmatpush.msra.mxu0 %v175
    %344 = vmatpush.msra.mxu0 %v173
    %345 = vmatpush.msra.mxu0 %v171
    %346 = vmatpush.msra.mxu0 %v169
    %347 = vmatpush.msra.mxu0 %v167
    %348 = vmatpush.msra.mxu0 %v165
    %349 = vmatpush.msra.mxu0 %v163
    %350 = vmatpush.msra.mxu0 %v161
    %351 = vmatpush.msra.mxu0 %v159
    %352 = vmatmul.f32.gmra.mxu0 %v61
    %v353 = vpop.f32.mrf.mxu0
    %v354 = vadd.f32 %v334, %v353
    %355 = vdwg.mxu0
    %356 = vmax.xlane.f32.xlu0 %v274
    %v357 = vpop.xlane.xlu0 %356
    %v358 = vsub.f32 %v274, %v357
    %v359 = vmul.f32 %v358, 1.442695
    %v360 = vpow.pop %v359
    %361 = vadd.xlane.f32.xlu0 %v360
    %v362 = vpop.xlane.xlu0 %361
    %v363 = vrcp.pop %v362
    %v364 = vmul.f32 %v362, %v363
    %v365 = vsub.f32 2.0, %v364
    %v366 = vmul.f32 %v363, %v365
    %v367 = vmul.f32 %v360, %v366
    %368 = vst [vmem:[#allocation8] sm:$0xff] %v367
    %369 = vmax.xlane.f32.xlu0 %v354
    %v370 = vpop.xlane.xlu0 %369
    %v371 = vsub.f32 %v354, %v370
    %v372 = vmul.f32 %v371, 1.442695
    %v373 = vpow.pop %v372
    %374 = vadd.xlane.f32.xlu0 %v373
    %v375 = vpop.xlane.xlu0 %374
    %v376 = vrcp.pop %v375
    %v377 = vmul.f32 %v375, %v376
    %v378 = vsub.f32 2.0, %v377
    %v379 = vmul.f32 %v376, %v378
    %v380 = vmul.f32 %v373, %v379
    %381 = vst [vmem:[#allocation8 + $0x8] sm:$0xff] %v380
    // Predicated region
    $region26: #{tpu_custom_call.1} parent=1 // pred_check
      _
    $region27: #{tpu_custom_call.1} parent=1 // pred_check_branch
      %383 = sbr.rel (0) target = $region29
    $region28: #{tpu_custom_call.1} parent=1 // pred_region
      %385 = vsyncadd [#allocation4], 0
      %s387 = sshll.u32 [#allocation8], 4
      %s388 = int_to_ptr.vmem [resolvable:$true] %s387
      %s389 = sshll.u32 %s3, 4
      %s390 = int_to_ptr.hbm [resolvable:$true] %s389
      %392 = dma.vmem_to_hbm [thread:$0]  %s388, 256, %s390, [#allocation4]
    $region29: #{tpu_custom_call.1} parent=1 // pred_fallthru
      _
    // Predicated region
    $region30: #{tpu_custom_call.1} parent=1 // pred_check
      _
    $region31: #{tpu_custom_call.1} parent=1 // pred_check_branch
      %394 = sbr.rel (0) target = $region33
    $region32: #{tpu_custom_call.1} parent=1 // pred_region
      %396 = dma.done [#allocation4], 256
    $region33: #{tpu_custom_call.1} parent=1 // pred_fallthru
      _
    %397 = vsyncpa [#allocation3], 1
    %398 = vsyncpa [#allocation6], 1
    %399 = vsyncpa [#allocation4], 1

</llo_original>
